<compile_context>
chip_gen: v7x
topology: tpu7x:2x2x1
jax: 0.10.0
libtpu: 0.0.40
codegen_flags: <defaults>
</compile_context>

<pallas_src>
import functools

import jax
import jax.numpy as jnp
import numpy as np
from jax import lax
from jax.experimental import pallas as pl
from jax.experimental.pallas import tpu as pltpu


def bottleneck_kernel(x_ref, w1_ref, w2_ref, w3_ref, b_ref, mask_ref, o_ref, *,
                      W, width_p):
    """One grid step processes Nb images as a (C, L) slab with L = Nb*H*W."""
    L = x_ref.shape[1]

    b = b_ref[...]                              # (2*width_p + Cout, 1) f32
    b1 = b[0:width_p]
    b2 = b[width_p:2 * width_p]
    b3 = b[2 * width_p:]

    # --- conv1 (1x1; BN1 scale folded into bf16 weights) + bias + relu -------
    x_bf = x_ref[...]                           # (Cin, L) bf16
    h1 = jnp.dot(w1_ref[...], x_bf, preferred_element_type=jnp.float32)
    h1 = jnp.maximum(h1 + b1, 0.0)              # (width_p, L) f32

    # --- conv2 (3x3, stride=1, pad=1; BN2 folded) --------------------------
    # Each spatial tap is a lane rotation (XLU) of the flat slab, zeroed at the
    # image borders by a precomputed mask (VPU multiply).  All 9 taps are
    # concatenated along sublanes and contracted in ONE K = 9*width_p matmul.
    taps = []
    for ky in range(3):
        for kx in range(3):
            d = (ky - 1) * W + (kx - 1)
            k = ky * 3 + kx
            if d == 0:
                taps.append(h1)
            else:
                t = pltpu.roll(h1, shift=(-d) % L, axis=1)
                taps.append(t * mask_ref[k])    # mask uses within-image coords
    taps = jnp.concatenate(taps, axis=0).astype(jnp.bfloat16)  # (9*width_p, L)
    h2 = jnp.dot(w2_ref[...], taps, preferred_element_type=jnp.float32)
    h2 = jnp.maximum(h2 + b2, 0.0)              # (width_p, L) f32

    # --- conv3 (1x1; BN3 folded) + bias + residual + relu -------------------
    h3 = jnp.dot(w3_ref[...], h2.astype(jnp.bfloat16),
                 preferred_element_type=jnp.float32)
    out = jnp.maximum(h3 + b3 + x_bf.astype(jnp.float32), 0.0)
    o_ref[...] = out.astype(o_ref.dtype)


def bottleneck_pallas(x_nchw, w1, w2_flat, w3, b_all):
    """x_nchw: (N, Cin, H, W) f32.
    w1: (width_p, Cin) bf16 (BN1 folded), w2_flat: (width_p, 9*width_p) bf16
    (BN2 folded), w3: (Cout, width_p) bf16 (BN3 folded),
    b_all: (2*width_p + Cout, 1) f32 = [b1; b2; b3]."""
    N, Cin, H, W = x_nchw.shape
    width_p = w1.shape[0]
    Cout = w3.shape[0]
    assert Cout == Cin, "residual add requires inplanes == planes * expansion"
    HW = H * W

    # >=2 "parallel" grid steps so v7x's two TensorCores both get work; each
    # step batches N//G images (amortizes the ~0.35 us per-step overhead).
    G = 2 if (N >= 2 and N % 2 == 0) else 1
    Nb = N // G
    L = Nb * HW

    # Layout plumbing (wrapper-side, fused by XLA): channels-flat lane-dense
    # (Cin, N*HW) slab in bf16 for the kernel's HBM I/O.
    x_flat = jnp.transpose(x_nchw.reshape(N, Cin, HW), (1, 0, 2)
                           ).reshape(Cin, N * HW).astype(jnp.bfloat16)

    # Precomputed 3x3 boundary masks (within-image coords -> rolls cannot leak
    # pixels across image boundaries along the folded lane axis).
    pos = jnp.arange(HW, dtype=jnp.int32)
    hh, ww = pos // W, pos % W
    rows = []
    for ky in range(3):
        for kx in range(3):
            dy, dx = ky - 1, kx - 1
            rows.append(((hh + dy >= 0) & (hh + dy < H) &
                         (ww + dx >= 0) & (ww + dx < W)).astype(jnp.float32))
    mask = jnp.stack(rows)                                  # (9, HW)
    mask = jnp.broadcast_to(jnp.tile(mask, (1, Nb))[:, None, :],
                            (9, width_p, L))

    kernel = functools.partial(bottleneck_kernel, W=W, width_p=width_p)
    const = lambda a: pl.BlockSpec(a.shape, lambda g: (0,) * a.ndim)

    out = pl.pallas_call(
        kernel,
        out_shape=jax.ShapeDtypeStruct((Cout, N * HW), jnp.bfloat16),
        grid_spec=pltpu.PrefetchScalarGridSpec(
            num_scalar_prefetch=0,
            grid=(G,),
            in_specs=[
                pl.BlockSpec((Cin, L), lambda g: (0, g)),
                const(w1), const(w2_flat), const(w3), const(b_all), const(mask),
            ],
            out_specs=pl.BlockSpec((Cout, L), lambda g: (0, g)),
        ),
        compiler_params=pltpu.CompilerParams(
            dimension_semantics=("parallel",)),
    )(x_flat, w1, w2_flat, w3, b_all, mask)

    out = out.astype(jnp.float32).reshape(Cout, N, HW)
    return jnp.transpose(out, (1, 0, 2)).reshape(N, Cout, H, W)


def fold_bn(gamma, beta, mean, var, eps=1e-5):
    scale = gamma / jnp.sqrt(var + eps)
    bias = beta - mean * scale
    return scale, bias


def prepare_params(w1_oihw, w2_oihw, w3_oihw, bn1, bn2, bn3):
    """Fold BN scales into the conv weights (bf16 for the MXU), flatten the 3x3
    weight into a (width_p, 9*width_p) slab matching the kernel's tap-concat
    order, pad the internal width to a multiple of 8 (padded channels stay
    exactly zero through relu), and merge the three bias vectors."""
    (s1, b1), (s2, b2), (s3, b3) = bn1, bn2, bn3
    width = w1_oihw.shape[0]
    width_p = max(8, -(-width // 8) * 8)
    pad = width_p - width

    w1 = w1_oihw[:, :, 0, 0] * s1[:, None]                                # (width, Cin)
    w2 = jnp.transpose(w2_oihw, (2, 3, 0, 1)) * s2[None, None, :, None]   # (kh,kw,O,I)
    w3 = w3_oihw[:, :, 0, 0] * s3[:, None]                                # (Cout, width)

    w1 = jnp.pad(w1, ((0, pad), (0, 0)))
    w2 = jnp.pad(w2, ((0, 0), (0, 0), (0, pad), (0, pad)))
    w3 = jnp.pad(w3, ((0, 0), (0, pad)))

    # (kh,kw,O,I) -> (O, kh*kw*I): column (ky*3+kx)*width_p + i matches the
    # kernel's tap concatenation (tap-major, input-channel-minor).
    w2_flat = jnp.transpose(w2, (2, 0, 1, 3)).reshape(width_p, 9 * width_p)

    b1p = jnp.pad(b1, (0, pad))
    b2p = jnp.pad(b2, (0, pad))
    b_all = jnp.concatenate([b1p, b2p, b3]).reshape(-1, 1).astype(jnp.float32)

    return (w1.astype(jnp.bfloat16), w2_flat.astype(jnp.bfloat16),
            w3.astype(jnp.bfloat16), b_all)


def reference_jax(x, w1_oihw, w2_oihw, w3_oihw, bns):
    """Plain-JAX f32 reference (lax conv, NCHW) for correctness checking."""
    dn = ("NCHW", "OIHW", "NCHW")

    def conv(h, w, pad):
        return lax.conv_general_dilated(h, w, (1, 1), pad, dimension_numbers=dn,
                                        precision=lax.Precision.HIGHEST)

    def bn(h, sb):
        s, b = sb
        return h * s[None, :, None, None] + b[None, :, None, None]

    h = jnp.maximum(bn(conv(x, w1_oihw, "VALID"), bns[0]), 0.0)
    h = jnp.maximum(bn(conv(h, w2_oihw, "SAME"), bns[1]), 0.0)
    h = bn(conv(h, w3_oihw, "VALID"), bns[2])
    return jnp.maximum(h + x, 0.0)


if __name__ == "__main__":
    # Bottleneck(inplanes=16, planes=4) -> width=4, output channels = 4*4 = 16.
    N, H, W = 4, 16, 16
    inplanes, planes, expansion = 16, 4, 4
    width = planes            # base_width=64, groups=1
    cout = planes * expansion

    key = jax.random.PRNGKey(0)
    ks = jax.random.split(key, 8)

    x = jax.random.normal(ks[0], (N, inplanes, H, W), jnp.float32)   # NCHW

    # Conv weights in PyTorch OIHW layout (as the module's __init__ defines them).
    w1_oihw = 0.2 * jax.random.normal(ks[1], (width, inplanes, 1, 1), jnp.float32)
    w2_oihw = 0.2 * jax.random.normal(ks[2], (width, width, 3, 3), jnp.float32)
    w3_oihw = 0.2 * jax.random.normal(ks[3], (cout, width, 1, 1), jnp.float32)

    def bn_params(k, c):
        k1, k2, k3, k4 = jax.random.split(k, 4)
        gamma = 1.0 + 0.1 * jax.random.normal(k1, (c,), jnp.float32)
        beta = 0.1 * jax.random.normal(k2, (c,), jnp.float32)
        mean = 0.1 * jax.random.normal(k3, (c,), jnp.float32)
        var = jnp.abs(1.0 + 0.1 * jax.random.normal(k4, (c,), jnp.float32))
        return fold_bn(gamma, beta, mean, var)

    bn1 = bn_params(ks[4], width)
    bn2 = bn_params(ks[5], width)
    bn3 = bn_params(ks[6], cout)

    params = prepare_params(w1_oihw, w2_oihw, w3_oihw, bn1, bn2, bn3)

    fwd = jax.jit(bottleneck_pallas)
    out = jax.block_until_ready(fwd(x, *params))
    ref = jax.block_until_ready(reference_jax(x, w1_oihw, w2_oihw, w3_oihw,
                                              (bn1, bn2, bn3)))
    # bf16 weights/activations on the MXU + bf16 HBM I/O => looser tolerances
    # than the all-f32 variant.
    np.testing.assert_allclose(np.asarray(out), np.asarray(ref),
                               rtol=0.1, atol=0.1)
    print("KERNEL_OK")
</pallas_src>

<mosaic_0001>
module attributes {stable_mosaic.version = 11 : i64} {
  func.func @bottleneck_kernel(%arg0: i32, %arg1: memref<16x512xbf16, #tpu.memory_space<vmem>>, %arg2: memref<8x16xbf16, #tpu.memory_space<vmem>>, %arg3: memref<8x72xbf16, #tpu.memory_space<vmem>>, %arg4: memref<16x8xbf16, #tpu.memory_space<vmem>>, %arg5: memref<32x1xf32, #tpu.memory_space<vmem>>, %arg6: memref<9x8x512xf32, #tpu.memory_space<vmem>>, %arg7: memref<16x512xbf16, #tpu.memory_space<vmem>>) attributes {dimension_semantics = [#tpu.dimension_semantics<parallel>], iteration_bounds = array<i64: 2>, scalar_prefetch = 0 : i64, scratch_operands = 0 : i64, tpu.core_type = #tpu.core_type<tc>, window_params = [{transform_indices = @transform_0, window_bounds = array<i64: 16, 512>}, {pipeline_mode = #tpu.pipeline_mode<synchronous>, transform_indices = @transform_1, window_bounds = array<i64: 8, 16>}, {pipeline_mode = #tpu.pipeline_mode<synchronous>, transform_indices = @transform_2, window_bounds = array<i64: 8, 72>}, {pipeline_mode = #tpu.pipeline_mode<synchronous>, transform_indices = @transform_3, window_bounds = array<i64: 16, 8>}, {pipeline_mode = #tpu.pipeline_mode<synchronous>, transform_indices = @transform_4, window_bounds = array<i64: 32, 1>}, {pipeline_mode = #tpu.pipeline_mode<synchronous>, transform_indices = @transform_5, window_bounds = array<i64: 9, 8, 512>}, {transform_indices = @transform_6, window_bounds = array<i64: 16, 512>}]} {
    %c0 = arith.constant 0 : index
    %c0_0 = arith.constant 0 : index
    %0 = vector.load %arg5[%c0, %c0_0] : memref<32x1xf32, #tpu.memory_space<vmem>>, vector<32x1xf32>
    %1 = vector.extract_strided_slice %0 {offsets = [0, 0], sizes = [8, 1], strides = [1, 1]} : vector<32x1xf32> to vector<8x1xf32>
    %2 = vector.extract_strided_slice %0 {offsets = [8, 0], sizes = [8, 1], strides = [1, 1]} : vector<32x1xf32> to vector<8x1xf32>
    %3 = vector.extract_strided_slice %0 {offsets = [16, 0], sizes = [16, 1], strides = [1, 1]} : vector<32x1xf32> to vector<16x1xf32>
    %c0_1 = arith.constant 0 : index
    %c0_2 = arith.constant 0 : index
    %4 = vector.load %arg1[%c0_1, %c0_2] : memref<16x512xbf16, #tpu.memory_space<vmem>>, vector<16x512xbf16>
    %c0_3 = arith.constant 0 : index
    %c0_4 = arith.constant 0 : index
    %5 = vector.load %arg2[%c0_3, %c0_4] : memref<8x16xbf16, #tpu.memory_space<vmem>>, vector<8x16xbf16>
    %cst = arith.constant dense<0.000000e+00> : vector<8x512xf32>
    %6 = tpu.matmul %5, %4, %cst {dimension_numbers = #tpu.dot_dimension_numbers<[1], [0], [0], [1], [0, 0, 1, 1], [], []>} : vector<8x16xbf16>, vector<16x512xbf16>, vector<8x512xf32> -> vector<8x512xf32>
    %7 = vector.broadcast %1 : vector<8x1xf32> to vector<8x512xf32>
    %8 = arith.addf %6, %7 : vector<8x512xf32>
    %cst_5 = arith.constant 0.000000e+00 : f32
    %9 = vector.broadcast %cst_5 : f32 to vector<8x512xf32>
    %10 = arith.maximumf %8, %9 : vector<8x512xf32>
    %c17_i32 = arith.constant 17 : i32
    %11 = tpu.dynamic_rotate %10 by %c17_i32 dim 1 : vector<8x512xf32>, i32 -> vector<8x512xf32>
    %c0_6 = arith.constant 0 : index
    %c0_7 = arith.constant 0 : index
    %c0_8 = arith.constant 0 : index
    %12 = vector.load %arg6[%c0_6, %c0_7, %c0_8] : memref<9x8x512xf32, #tpu.memory_space<vmem>>, vector<1x8x512xf32>
    %13 = vector.shape_cast %12 : vector<1x8x512xf32> to vector<8x512xf32>
    %14 = arith.mulf %11, %13 : vector<8x512xf32>
    %c16_i32 = arith.constant 16 : i32
    %15 = tpu.dynamic_rotate %10 by %c16_i32 dim 1 : vector<8x512xf32>, i32 -> vector<8x512xf32>
    %c1 = arith.constant 1 : index
    %c0_9 = arith.constant 0 : index
    %c0_10 = arith.constant 0 : index
    %16 = vector.load %arg6[%c1, %c0_9, %c0_10] : memref<9x8x512xf32, #tpu.memory_space<vmem>>, vector<1x8x512xf32>
    %17 = vector.shape_cast %16 : vector<1x8x512xf32> to vector<8x512xf32>
    %18 = arith.mulf %15, %17 : vector<8x512xf32>
    %c15_i32 = arith.constant 15 : i32
    %19 = tpu.dynamic_rotate %10 by %c15_i32 dim 1 : vector<8x512xf32>, i32 -> vector<8x512xf32>
    %c2 = arith.constant 2 : index
    %c0_11 = arith.constant 0 : index
    %c0_12 = arith.constant 0 : index
    %20 = vector.load %arg6[%c2, %c0_11, %c0_12] : memref<9x8x512xf32, #tpu.memory_space<vmem>>, vector<1x8x512xf32>
    %21 = vector.shape_cast %20 : vector<1x8x512xf32> to vector<8x512xf32>
    %22 = arith.mulf %19, %21 : vector<8x512xf32>
    %c1_i32 = arith.constant 1 : i32
    %23 = tpu.dynamic_rotate %10 by %c1_i32 dim 1 : vector<8x512xf32>, i32 -> vector<8x512xf32>
    %c3 = arith.constant 3 : index
    %c0_13 = arith.constant 0 : index
    %c0_14 = arith.constant 0 : index
    %24 = vector.load %arg6[%c3, %c0_13, %c0_14] : memref<9x8x512xf32, #tpu.memory_space<vmem>>, vector<1x8x512xf32>
    %25 = vector.shape_cast %24 : vector<1x8x512xf32> to vector<8x512xf32>
    %26 = arith.mulf %23, %25 : vector<8x512xf32>
    %c511_i32 = arith.constant 511 : i32
    %27 = tpu.dynamic_rotate %10 by %c511_i32 dim 1 : vector<8x512xf32>, i32 -> vector<8x512xf32>
    %c5 = arith.constant 5 : index
    %c0_15 = arith.constant 0 : index
    %c0_16 = arith.constant 0 : index
    %28 = vector.load %arg6[%c5, %c0_15, %c0_16] : memref<9x8x512xf32, #tpu.memory_space<vmem>>, vector<1x8x512xf32>
    %29 = vector.shape_cast %28 : vector<1x8x512xf32> to vector<8x512xf32>
    %30 = arith.mulf %27, %29 : vector<8x512xf32>
    %c497_i32 = arith.constant 497 : i32
    %31 = tpu.dynamic_rotate %10 by %c497_i32 dim 1 : vector<8x512xf32>, i32 -> vector<8x512xf32>
    %c6 = arith.constant 6 : index
    %c0_17 = arith.constant 0 : index
    %c0_18 = arith.constant 0 : index
    %32 = vector.load %arg6[%c6, %c0_17, %c0_18] : memref<9x8x512xf32, #tpu.memory_space<vmem>>, vector<1x8x512xf32>
    %33 = vector.shape_cast %32 : vector<1x8x512xf32> to vector<8x512xf32>
    %34 = arith.mulf %31, %33 : vector<8x512xf32>
    %c496_i32 = arith.constant 496 : i32
    %35 = tpu.dynamic_rotate %10 by %c496_i32 dim 1 : vector<8x512xf32>, i32 -> vector<8x512xf32>
    %c7 = arith.constant 7 : index
    %c0_19 = arith.constant 0 : index
    %c0_20 = arith.constant 0 : index
    %36 = vector.load %arg6[%c7, %c0_19, %c0_20] : memref<9x8x512xf32, #tpu.memory_space<vmem>>, vector<1x8x512xf32>
    %37 = vector.shape_cast %36 : vector<1x8x512xf32> to vector<8x512xf32>
    %38 = arith.mulf %35, %37 : vector<8x512xf32>
    %c495_i32 = arith.constant 495 : i32
    %39 = tpu.dynamic_rotate %10 by %c495_i32 dim 1 : vector<8x512xf32>, i32 -> vector<8x512xf32>
    %c8 = arith.constant 8 : index
    %c0_21 = arith.constant 0 : index
    %c0_22 = arith.constant 0 : index
    %40 = vector.load %arg6[%c8, %c0_21, %c0_22] : memref<9x8x512xf32, #tpu.memory_space<vmem>>, vector<1x8x512xf32>
    %41 = vector.shape_cast %40 : vector<1x8x512xf32> to vector<8x512xf32>
    %42 = arith.mulf %39, %41 : vector<8x512xf32>
    %43 = tpu.concatenate %14, %18, %22, %26, %10, %30, %34, %38, %42 in 0 : vector<8x512xf32>, vector<8x512xf32>, vector<8x512xf32>, vector<8x512xf32>, vector<8x512xf32>, vector<8x512xf32>, vector<8x512xf32>, vector<8x512xf32>, vector<8x512xf32> -> vector<72x512xf32>
    %44 = arith.truncf %43 : vector<72x512xf32> to vector<72x512xbf16>
    %c0_23 = arith.constant 0 : index
    %c0_24 = arith.constant 0 : index
    %45 = vector.load %arg3[%c0_23, %c0_24] : memref<8x72xbf16, #tpu.memory_space<vmem>>, vector<8x72xbf16>
    %cst_25 = arith.constant dense<0.000000e+00> : vector<8x512xf32>
    %46 = tpu.matmul %45, %44, %cst_25 {dimension_numbers = #tpu.dot_dimension_numbers<[1], [0], [0], [1], [0, 0, 1, 1], [], []>} : vector<8x72xbf16>, vector<72x512xbf16>, vector<8x512xf32> -> vector<8x512xf32>
    %47 = vector.broadcast %2 : vector<8x1xf32> to vector<8x512xf32>
    %48 = arith.addf %46, %47 : vector<8x512xf32>
    %cst_26 = arith.constant 0.000000e+00 : f32
    %49 = vector.broadcast %cst_26 : f32 to vector<8x512xf32>
    %50 = arith.maximumf %48, %49 : vector<8x512xf32>
    %c0_27 = arith.constant 0 : index
    %c0_28 = arith.constant 0 : index
    %51 = vector.load %arg4[%c0_27, %c0_28] : memref<16x8xbf16, #tpu.memory_space<vmem>>, vector<16x8xbf16>
    %52 = arith.truncf %50 : vector<8x512xf32> to vector<8x512xbf16>
    %cst_29 = arith.constant dense<0.000000e+00> : vector<16x512xf32>
    %53 = tpu.matmul %51, %52, %cst_29 {dimension_numbers = #tpu.dot_dimension_numbers<[1], [0], [0], [1], [0, 0, 1, 1], [], []>} : vector<16x8xbf16>, vector<8x512xbf16>, vector<16x512xf32> -> vector<16x512xf32>
    %54 = vector.broadcast %3 : vector<16x1xf32> to vector<16x512xf32>
    %55 = arith.addf %53, %54 : vector<16x512xf32>
    %56 = arith.extf %4 : vector<16x512xbf16> to vector<16x512xf32>
    %57 = arith.addf %55, %56 : vector<16x512xf32>
    %cst_30 = arith.constant 0.000000e+00 : f32
    %58 = vector.broadcast %cst_30 : f32 to vector<16x512xf32>
    %59 = arith.maximumf %57, %58 : vector<16x512xf32>
    %60 = arith.truncf %59 : vector<16x512xf32> to vector<16x512xbf16>
    %c0_31 = arith.constant 0 : index
    %c0_32 = arith.constant 0 : index
    %61 = vector.load %arg7[%c0_31, %c0_32] : memref<16x512xbf16, #tpu.memory_space<vmem>>, vector<16x512xbf16>
    tpu.vector_store %arg7[%c0_31, %c0_32], %60 {strides = array<i32>} : memref<16x512xbf16, #tpu.memory_space<vmem>>, vector<16x512xbf16>,
    return
  }
  func.func @transform_0(%arg0: i32) -> (i32, i32) {
    %c0_i32 = arith.constant 0 : i32
    %c0_i32_0 = arith.constant 0 : i32
    return %c0_i32, %arg0 : i32, i32
  }
  func.func @transform_1(%arg0: i32) -> (i32, i32) {
    %c0_i32 = arith.constant 0 : i32
    %c0_i32_0 = arith.constant 0 : i32
    %c0_i32_1 = arith.constant 0 : i32
    return %c0_i32, %c0_i32_0 : i32, i32
  }
  func.func @transform_2(%arg0: i32) -> (i32, i32) {
    %c0_i32 = arith.constant 0 : i32
    %c0_i32_0 = arith.constant 0 : i32
    %c0_i32_1 = arith.constant 0 : i32
    return %c0_i32, %c0_i32_0 : i32, i32
  }
  func.func @transform_3(%arg0: i32) -> (i32, i32) {
    %c0_i32 = arith.constant 0 : i32
    %c0_i32_0 = arith.constant 0 : i32
    %c0_i32_1 = arith.constant 0 : i32
    return %c0_i32, %c0_i32_0 : i32, i32
  }
  func.func @transform_4(%arg0: i32) -> (i32, i32) {
    %c0_i32 = arith.constant 0 : i32
    %c0_i32_0 = arith.constant 0 : i32
    %c0_i32_1 = arith.constant 0 : i32
    return %c0_i32, %c0_i32_0 : i32, i32
  }
  func.func @transform_5(%arg0: i32) -> (i32, i32, i32) {
    %c0_i32 = arith.constant 0 : i32
    %c0_i32_0 = arith.constant 0 : i32
    %c0_i32_1 = arith.constant 0 : i32
    %c0_i32_2 = arith.constant 0 : i32
    return %c0_i32, %c0_i32_0, %c0_i32_1 : i32, i32, i32
  }
  func.func @transform_6(%arg0: i32) -> (i32, i32) {
    %c0_i32 = arith.constant 0 : i32
    %c0_i32_0 = arith.constant 0 : i32
    return %c0_i32, %arg0 : i32, i32
  }
}

</mosaic_0001>

<llo_original>
// kernel: bottleneck_pallas.1
$region0: #{bottleneck_pallas.1}
  #allocation0 [shape = 'u32[]', space=smem, size = 0x4, offset = 0x4, fixed_abs, tag = 'smem constant byte address 0x4 - core index']
  #allocation1 [shape = 'u32[144,128]{1,0:T(1,128)}', space=vmem, size = 0x12000, scoped, tag = 'internal scratch']
  %s0 = inlined_call_operand.vmem [shape: bf16[16,1024], index: 0, kind: input, shape index: {}]
  %s1 = inlined_call_operand.vmem [shape: bf16[8,16], index: 1, kind: input, shape index: {}]
  %s2 = inlined_call_operand.vmem [shape: bf16[8,72], index: 2, kind: input, shape index: {}]
  %s3 = inlined_call_operand.vmem [shape: bf16[16,8], index: 3, kind: input, shape index: {}]
  %s4 = inlined_call_operand.vmem [shape: f32[32,1], index: 4, kind: input, shape index: {}]
  %s5 = inlined_call_operand.vmem [shape: f32[9,8,512], index: 5, kind: input, shape index: {}]
  %s6 = inlined_call_operand.vmem [shape: bf16[16,1024], index: 6, kind: output, shape index: {}]
  %s7 = sld [smem:[#allocation0]]
  $region99: #{bottleneck_pallas.1} parent=0
    _
  %s9 = ssub.s32 1, %s7
  %s10 = scalar_select 0, %s9, %s7
  $region1: #{bottleneck_pallas.1} parent=0
    #allocation2 [shape = 'u8[32768]{0}', space=vmem, size = 0x8000, scoped, tag = 'input window, operand 0']
    #allocation3 [shape = 'u8[32768]{0}', space=vmem, size = 0x8000, scoped, tag = 'output window, operand 0']
    loop: start=0, step=1, limit=4
    $region2: #{bottleneck_pallas.1} parent=1 // loop_pre_header
      _
    $region3: #{bottleneck_pallas.1} parent=1 // loop_header
      %s12 = sphi 0, %s16
      %p13 = scmp.ge.s32.totalorder %s12, 4
      %s22 = sphi 0, %s24
      %s25 = sphi 0, %s22
      %s26 = sphi 0, %s25
      %s42 = sphi 0, %s26
      %s46 = sphi 0, %s46
      %s48 = sphi 0, %s46
      %s49 = sphi 0, %s48
      %s63 = sphi 0, %s49
      %s67 = sphi 0, %s67
      %s69 = sphi 0, %s67
      %s70 = sphi 0, %s69
      %s84 = sphi 0, %s70
      %s88 = sphi 0, %s88
      %s90 = sphi 0, %s88
      %s91 = sphi 0, %s90
      %s105 = sphi 0, %s91
      %s109 = sphi 0, %s109
      %s111 = sphi 0, %s109
      %s112 = sphi 0, %s111
      %s126 = sphi 0, %s112
      %s130 = sphi 0, %s130
      %s132 = sphi 0, %s130
      %s133 = sphi 0, %s132
      %s147 = sphi 0, %s133
      %s153 = sphi 0, %s155
      %s156 = sphi 0, %s153
      %s157 = sphi 0, %s156
      %s173 = sphi 0, %s157
    $region4: #{bottleneck_pallas.1} parent=1 // loop_header_branch
      %15 = sbr.rel (%p13) target = $region8
    $region5: #{bottleneck_pallas.1} parent=1 // loop_body
      %s17 = ssub.s32 %s12, 1
      %s18 = ssub.s32 %s12, 2
      %s19 = sadd.s32 %s12, 1
      %s20 = ssub.s32 %s12, %s19
      %p21 = scmp.eq.s32.totalorder %s20, 0
      %s23 = sadd.s32 %s22, 1
      %s24 = scalar_select %p21, %s22, %s23
      %p27 = pneg %p21
      %p28 = scmp.eq.s32.totalorder %s12, 1
      %p29 = por %p27, %p28
      %p30 = scmp.ne.s32.totalorder %s22, %s25
      %p31 = scmp.eq.s32.totalorder %s12, 0
      %p32 = por %p30, %p31
      %p33 = scmp.ne.s32.totalorder %s22, %s25
      %p34 = scmp.eq.s32.totalorder %s17, 1
      %p35 = por %p33, %p34
      %p36 = scmp.ne.s32.totalorder %s25, %s26
      %p37 = scmp.eq.s32.totalorder %s17, 0
      %p38 = por %p36, %p37
      %p39 = scmp.ne.s32.totalorder %s25, %s26
      %p40 = scmp.eq.s32.totalorder %s18, 1
      %p41 = por %p39, %p40
      %p43 = scmp.ne.s32.totalorder %s26, %s42
      %p44 = scmp.eq.s32.totalorder %s18, 0
      %p45 = por %p43, %p44
      %s47 = sadd.s32 %s46, 1
      %p50 = scmp.eq.s32.totalorder %s12, 1
      %p51 = scmp.ne.s32.totalorder %s46, %s48
      %p52 = scmp.eq.s32.totalorder %s12, 0
      %p53 = por %p51, %p52
      %p54 = scmp.ne.s32.totalorder %s46, %s48
      %p55 = scmp.eq.s32.totalorder %s17, 1
      %p56 = por %p54, %p55
      %p57 = scmp.ne.s32.totalorder %s48, %s49
      %p58 = scmp.eq.s32.totalorder %s17, 0
      %p59 = por %p57, %p58
      %p60 = scmp.ne.s32.totalorder %s48, %s49
      %p61 = scmp.eq.s32.totalorder %s18, 1
      %p62 = por %p60, %p61
      %p64 = scmp.ne.s32.totalorder %s49, %s63
      %p65 = scmp.eq.s32.totalorder %s18, 0
      %p66 = por %p64, %p65
      %s68 = sadd.s32 %s67, 1
      %p71 = scmp.eq.s32.totalorder %s12, 1
      %p72 = scmp.ne.s32.totalorder %s67, %s69
      %p73 = scmp.eq.s32.totalorder %s12, 0
      %p74 = por %p72, %p73
      %p75 = scmp.ne.s32.totalorder %s67, %s69
      %p76 = scmp.eq.s32.totalorder %s17, 1
      %p77 = por %p75, %p76
      %p78 = scmp.ne.s32.totalorder %s69, %s70
      %p79 = scmp.eq.s32.totalorder %s17, 0
      %p80 = por %p78, %p79
      %p81 = scmp.ne.s32.totalorder %s69, %s70
      %p82 = scmp.eq.s32.totalorder %s18, 1
      %p83 = por %p81, %p82
      %p85 = scmp.ne.s32.totalorder %s70, %s84
      %p86 = scmp.eq.s32.totalorder %s18, 0
      %p87 = por %p85, %p86
      %s89 = sadd.s32 %s88, 1
      %p92 = scmp.eq.s32.totalorder %s12, 1
      %p93 = scmp.ne.s32.totalorder %s88, %s90
      %p94 = scmp.eq.s32.totalorder %s12, 0
      %p95 = por %p93, %p94
      %p96 = scmp.ne.s32.totalorder %s88, %s90
      %p97 = scmp.eq.s32.totalorder %s17, 1
      %p98 = por %p96, %p97
      %p99 = scmp.ne.s32.totalorder %s90, %s91
      %p100 = scmp.eq.s32.totalorder %s17, 0
      %p101 = por %p99, %p100
      %p102 = scmp.ne.s32.totalorder %s90, %s91
      %p103 = scmp.eq.s32.totalorder %s18, 1
      %p104 = por %p102, %p103
      %p106 = scmp.ne.s32.totalorder %s91, %s105
      %p107 = scmp.eq.s32.totalorder %s18, 0
      %p108 = por %p106, %p107
      %s110 = sadd.s32 %s109, 1
      %p113 = scmp.eq.s32.totalorder %s12, 1
      %p114 = scmp.ne.s32.totalorder %s109, %s111
      %p115 = scmp.eq.s32.totalorder %s12, 0
      %p116 = por %p114, %p115
      %p117 = scmp.ne.s32.totalorder %s109, %s111
      %p118 = scmp.eq.s32.totalorder %s17, 1
      %p119 = por %p117, %p118
      %p120 = scmp.ne.s32.totalorder %s111, %s112
      %p121 = scmp.eq.s32.totalorder %s17, 0
      %p122 = por %p120, %p121
      %p123 = scmp.ne.s32.totalorder %s111, %s112
      %p124 = scmp.eq.s32.totalorder %s18, 1
      %p125 = por %p123, %p124
      %p127 = scmp.ne.s32.totalorder %s112, %s126
      %p128 = scmp.eq.s32.totalorder %s18, 0
      %p129 = por %p127, %p128
      %s131 = sadd.s32 %s130, 1
      %p134 = scmp.eq.s32.totalorder %s12, 1
      %p135 = scmp.ne.s32.totalorder %s130, %s132
      %p136 = scmp.eq.s32.totalorder %s12, 0
      %p137 = por %p135, %p136
      %p138 = scmp.ne.s32.totalorder %s130, %s132
      %p139 = scmp.eq.s32.totalorder %s17, 1
      %p140 = por %p138, %p139
      %p141 = scmp.ne.s32.totalorder %s132, %s133
      %p142 = scmp.eq.s32.totalorder %s17, 0
      %p143 = por %p141, %p142
      %p144 = scmp.ne.s32.totalorder %s132, %s133
      %p145 = scmp.eq.s32.totalorder %s18, 1
      %p146 = por %p144, %p145
      %p148 = scmp.ne.s32.totalorder %s133, %s147
      %p149 = scmp.eq.s32.totalorder %s18, 0
      %p150 = por %p148, %p149
      %s151 = ssub.s32 %s12, %s19
      %p152 = scmp.eq.s32.totalorder %s151, 0
      %s154 = sadd.s32 %s153, 1
      %s155 = scalar_select %p152, %s153, %s154
      %p158 = pneg %p152
      %p159 = scmp.eq.s32.totalorder %s12, 1
      %p160 = por %p158, %p159
      %p161 = scmp.ne.s32.totalorder %s153, %s156
      %p162 = scmp.eq.s32.totalorder %s12, 0
      %p163 = por %p161, %p162
      %p164 = scmp.ne.s32.totalorder %s153, %s156
      %p165 = scmp.eq.s32.totalorder %s17, 1
      %p166 = por %p164, %p165
      %p167 = scmp.ne.s32.totalorder %s156, %s157
      %p168 = scmp.eq.s32.totalorder %s17, 0
      %p169 = por %p167, %p168
      %p170 = scmp.ne.s32.totalorder %s156, %s157
      %p171 = scmp.eq.s32.totalorder %s18, 1
      %p172 = por %p170, %p171
      %p174 = scmp.ne.s32.totalorder %s157, %s173
      %p175 = scmp.eq.s32.totalorder %s18, 0
      %p176 = por %p174, %p175
      %p177 = scmp.le.s32.totalorder 1, %s12
      %p178 = scmp.lt.s32.totalorder %s12, 3
      %p179 = pnand %p177, %p178
      %p180 = pneg %p179
      // Predicated region
      $region9: #{bottleneck_pallas.1} parent=5 // pred_check
        _
      $region10: #{bottleneck_pallas.1} parent=5 // pred_check_branch
        %182 = sbr.rel (%p179) target = $region12
      $region11: #{bottleneck_pallas.1} parent=5 // pred_region
        %s183 = ssub.s32 %s12, 1
        // Predicated region
        $region13: #{bottleneck_pallas.1} parent=11 // pred_check
          %p184 = pneg %p59
        $region14: #{bottleneck_pallas.1} parent=11 // pred_check_branch
          %186 = sbr.rel (%p184) target = $region16
        $region15: #{bottleneck_pallas.1} parent=11 // pred_region
          _
        $region16: #{bottleneck_pallas.1} parent=11 // pred_fallthru
          _
        // Predicated region
        $region17: #{bottleneck_pallas.1} parent=11 // pred_check
          %p187 = pneg %p80
        $region18: #{bottleneck_pallas.1} parent=11 // pred_check_branch
          %189 = sbr.rel (%p187) target = $region20
        $region19: #{bottleneck_pallas.1} parent=11 // pred_region
          _
        $region20: #{bottleneck_pallas.1} parent=11 // pred_fallthru
          _
        // Predicated region
        $region21: #{bottleneck_pallas.1} parent=11 // pred_check
          %p190 = pneg %p101
        $region22: #{bottleneck_pallas.1} parent=11 // pred_check_branch
          %192 = sbr.rel (%p190) target = $region24
        $region23: #{bottleneck_pallas.1} parent=11 // pred_region
          _
        $region24: #{bottleneck_pallas.1} parent=11 // pred_fallthru
          _
        // Predicated region
        $region25: #{bottleneck_pallas.1} parent=11 // pred_check
          %p193 = pneg %p122
        $region26: #{bottleneck_pallas.1} parent=11 // pred_check_branch
          %195 = sbr.rel (%p193) target = $region28
        $region27: #{bottleneck_pallas.1} parent=11 // pred_region
          _
        $region28: #{bottleneck_pallas.1} parent=11 // pred_fallthru
          _
        // Predicated region
        $region29: #{bottleneck_pallas.1} parent=11 // pred_check
          %p196 = pneg %p143
        $region30: #{bottleneck_pallas.1} parent=11 // pred_check_branch
          %198 = sbr.rel (%p196) target = $region32
        $region31: #{bottleneck_pallas.1} parent=11 // pred_region
          _
        $region32: #{bottleneck_pallas.1} parent=11 // pred_fallthru
          _
      $region12: #{bottleneck_pallas.1} parent=5 // pred_fallthru
        _
      %p199 = scmp.lt.s32.totalorder %s12, 2
      // Predicated region
      $region33: #{bottleneck_pallas.1} parent=5 // pred_check
        %p200 = pneg %p199
      $region34: #{bottleneck_pallas.1} parent=5 // pred_check_branch
        %202 = sbr.rel (%p200) target = $region36
      $region35: #{bottleneck_pallas.1} parent=5 // pred_region
        // Predicated region
        $region37: #{bottleneck_pallas.1} parent=35 // pred_check
          %p203 = pneg %p32
        $region38: #{bottleneck_pallas.1} parent=35 // pred_check_branch
          %205 = sbr.rel (%p203) target = $region40
        $region39: #{bottleneck_pallas.1} parent=35 // pred_region
          %s206 = sand.u32 %s22, 1
          %s207 = sand.u32 %s22, 1
          %s208 = smul.addr %s207, 32
          %s209 = scalar_lea.vmem [#allocation2], %s208
          %s210 = smul.u32 4, %s12
          %s211 = smul.addr %s210, 4
          %s212 = scalar_lea.vmem %s0, %s211
          // Predicated region
          $region41: #{bottleneck_pallas.1} parent=39 // pred_check
            _
          $region42: #{bottleneck_pallas.1} parent=39 // pred_check_branch
            %214 = sbr.rel (0) target = $region44
          $region43: #{bottleneck_pallas.1} parent=39 // pred_region
            // Predicated region
            $region45: #{bottleneck_pallas.1} parent=43 // pred_check
              _
            $region46: #{bottleneck_pallas.1} parent=43 // pred_check_branch
              %216 = sbr.rel (0) target = $region48
            $region47: #{bottleneck_pallas.1} parent=43 // pred_region
              loop: start=0, step=1, limit=1
              $region49: #{bottleneck_pallas.1} parent=47 // loop_pre_header
                _
              $region50: #{bottleneck_pallas.1} parent=47 // loop_header
                %s218 = sphi 0, %s222
                %p219 = scmp.ge.s32.totalorder %s218, 1
                %s223 = sphi %s212, %s212
                %s224 = sphi %s209, %s209
              $region51: #{bottleneck_pallas.1} parent=47 // loop_header_branch
                %221 = sbr.rel (%p219) target = $region55
              $region52: #{bottleneck_pallas.1} parent=47 // loop_body
                %v225 = vld [vmem:[%s223] sm:$0xff]
                %226 = vst [vmem:[%s224] sm:$0xff] %v225
                %v227 = vld [vmem:[%s223 + $0x8] sm:$0xff]
                %228 = vst [vmem:[%s224 + $0x8] sm:$0xff] %v227
                %v229 = vld [vmem:[%s223 + $0x20] sm:$0xff]
                %230 = vst [vmem:[%s224 + $0x10] sm:$0xff] %v229
                %v231 = vld [vmem:[%s223 + $0x28] sm:$0xff]
                %232 = vst [vmem:[%s224 + $0x18] sm:$0xff] %v231
              $region53: #{bottleneck_pallas.1} parent=47 // loop_footer
                %s222 = sadd.s32 1, %s218
              $region54: #{bottleneck_pallas.1} parent=47 // loop_footer_branch
                %217 = sbr.rel target = $region50
              $region55: #{bottleneck_pallas.1} parent=47 // loop_exit
                _
            $region48: #{bottleneck_pallas.1} parent=43 // pred_fallthru
              _
            // Predicated region
            $region56: #{bottleneck_pallas.1} parent=43 // pred_check
              _
            $region57: #{bottleneck_pallas.1} parent=43 // pred_check_branch
              %234 = sbr.rel target = $region59
            $region58: #{bottleneck_pallas.1} parent=43 // pred_region
              _
            $region59: #{bottleneck_pallas.1} parent=43 // pred_fallthru
              _
          $region44: #{bottleneck_pallas.1} parent=39 // pred_fallthru
            _
          %235 = vnop
        $region40: #{bottleneck_pallas.1} parent=35 // pred_fallthru
          _
      $region36: #{bottleneck_pallas.1} parent=5 // pred_fallthru
        _
      %p236 = scmp.le.s32.totalorder 1, %s12
      %p237 = scmp.lt.s32.totalorder %s12, 3
      %p238 = pnand %p236, %p237
      %p239 = pneg %p238
      // Predicated region
      $region60: #{bottleneck_pallas.1} parent=5 // pred_check
        _
      $region61: #{bottleneck_pallas.1} parent=5 // pred_check_branch
        %241 = sbr.rel (%p238) target = $region63
      $region62: #{bottleneck_pallas.1} parent=5 // pred_region
        %s242 = ssub.s32 %s12, 1
        %s243 = sand.u32 %s25, 1
        %s244 = sand.u32 %s25, 1
        %s245 = smul.addr %s244, 32
        %s246 = scalar_lea.vmem [#allocation2], %s245
        // Predicated region
        $region64: #{bottleneck_pallas.1} parent=62 // pred_check
          %p247 = pneg %p38
        $region65: #{bottleneck_pallas.1} parent=62 // pred_check_branch
          %249 = sbr.rel (%p247) target = $region67
        $region66: #{bottleneck_pallas.1} parent=62 // pred_region
          _
        $region67: #{bottleneck_pallas.1} parent=62 // pred_fallthru
          _
        %s250 = sand.u32 %s25, 1
        %s251 = sand.u32 %s25, 1
        %s252 = smul.addr %s251, 32
        %s253 = scalar_lea.vmem [#allocation2], %s252
        %p254 = pneg %p38
        %p255 = pneg %p35
        %p256 = pneg %p59
        %p257 = pneg %p56
        %p258 = pneg %p80
        %p259 = pneg %p77
        %p260 = pneg %p101
        %p261 = pneg %p98
        %p262 = pneg %p122
        %p263 = pneg %p119
        %p264 = pneg %p143
        %p265 = pneg %p140
        %p266 = pneg %p169
        %p267 = pneg %p166
        %s268 = sand.u32 %s156, 1
        %s269 = sand.u32 %s156, 1
        %s270 = smul.addr %s269, 32
        %s271 = scalar_lea.vmem [#allocation3], %s270
        %s272 = smul.u32 4, %s17
        %s273 = smul.u32 4, %s17
        %v275 = vld [vmem:[%s4] sm:$0xff]
        %v276 = vld [vmem:[%s4 + $0x8] sm:$0xff]
        %v277 = vld [vmem:[%s4 + $0x10] sm:$0xff]
        %v278 = vld [vmem:[%s4 + $0x18] sm:$0xff]
        %v279 = vld [vmem:[%s246] sm:$0xff]
        %v280 = vld [vmem:[%s246 + $0x8] sm:$0xff]
        %v281 = vld [vmem:[%s246 + $0x10] sm:$0xff]
        %v282 = vld [vmem:[%s246 + $0x18] sm:$0xff]
        %v283 = vld [vmem:[%s1] sm:$0xf]
        %285 = vset.pattern.permute.xlu0 0
        %286 = vperm.xlu0 %285, %v275
        %v287 = vpop.permute.xlu0 %286
        %v293 = vunpack.c.l.b16 %v279
        %v294 = vunpack.c.h.b16 %v279
        %v295 = vunpack.c.l.b16 %v280
        %v296 = vunpack.c.h.b16 %v280
        %v297 = vunpack.c.l.b16 %v281
        %v298 = vunpack.c.h.b16 %v281
        %v299 = vunpack.c.l.b16 %v282
        %v300 = vunpack.c.h.b16 %v282
        %v301 = vpack.c.b16 %v297, %v293
        %v302 = vpack.c.b16 %v298, %v294
        %v303 = vpack.c.b16 %v299, %v295
        %v304 = vpack.c.b16 %v300, %v296
        %vm309 = vcmask 130048
        %v311 = vsel %vm309, %v283, 0
        %313 = vmatprep.subr.bf16.mxu0 %v302
        %314 = vmatpush1.bf16.msra.mxu0 %v301
        %315 = vmatprep.subr.bf16.mxu0 0
        %316 = vmatpush1.bf16.msra.mxu0 0
        %317 = vmatprep.subr.bf16.mxu0 0
        %318 = vmatpush1.bf16.msra.mxu0 0
        %319 = vmatprep.subr.bf16.mxu0 0
        %320 = vmatpush1.bf16.msra.mxu0 0
        %321 = vmatprep.subr.bf16.mxu0 0
        %322 = vmatpush1.bf16.msra.mxu0 0
        %323 = vmatprep.subr.bf16.mxu0 0
        %324 = vmatpush1.bf16.msra.mxu0 0
        %325 = vmatprep.subr.bf16.mxu0 0
        %326 = vmatpush1.bf16.msra.mxu0 0
        %327 = vmatprep.subr.bf16.mxu0 0
        %328 = vmatpush1.bf16.msra.mxu0 0
        %329 = vmatprep.subr.bf16.mxu0 0
        %330 = vmatpush1.bf16.msra.mxu0 0
        %331 = vmatprep.subr.bf16.mxu0 0
        %332 = vmatpush1.bf16.msra.mxu0 0
        %333 = vmatprep.subr.bf16.mxu0 0
        %334 = vmatpush1.bf16.msra.mxu0 0
        %335 = vmatprep.subr.bf16.mxu0 0
        %336 = vmatpush1.bf16.msra.mxu0 0
        %337 = vmatprep.subr.bf16.mxu0 0
        %338 = vmatpush1.bf16.msra.mxu0 0
        %339 = vmatprep.subr.bf16.mxu0 0
        %340 = vmatpush1.bf16.msra.mxu0 0
        %341 = vmatprep.subr.bf16.mxu0 0
        %342 = vmatpush1.bf16.msra.mxu0 0
        %343 = vmatprep.subr.bf16.mxu0 0
        %344 = vmatpush1.bf16.msra.mxu0 0
        %345 = vmatprep.mubr.bf16.mxu0 0
        %346 = vmatmul.mubr.bf16.gmra.mrb[0].mxu0 %v311
        %v347 = vpop.f32.mrb[0].mxu0
        %v348 = vadd.f32 %v287, %v347
        %v349 = vpop.f32.mrb[0].mxu0
        %v350 = vadd.f32 %v287, %v349
        %v351 = vpop.f32.mrb[0].mxu0
        %v352 = vpop.f32.mrb[0].mxu0
        %353 = vdwg.mxu0
        %354 = vmatprep.subr.bf16.mxu0 %v304
        %355 = vmatpush1.bf16.msra.mxu0 %v303
        %356 = vmatprep.subr.bf16.mxu0 0
        %357 = vmatpush1.bf16.msra.mxu0 0
        %358 = vmatprep.subr.bf16.mxu0 0
        %359 = vmatpush1.bf16.msra.mxu0 0
        %360 = vmatprep.subr.bf16.mxu0 0
        %361 = vmatpush1.bf16.msra.mxu0 0
        %362 = vmatprep.subr.bf16.mxu0 0
        %363 = vmatpush1.bf16.msra.mxu0 0
        %364 = vmatprep.subr.bf16.mxu0 0
        %365 = vmatpush1.bf16.msra.mxu0 0
        %366 = vmatprep.subr.bf16.mxu0 0
        %367 = vmatpush1.bf16.msra.mxu0 0
        %368 = vmatprep.subr.bf16.mxu0 0
        %369 = vmatpush1.bf16.msra.mxu0 0
        %370 = vmatprep.subr.bf16.mxu0 0
        %371 = vmatpush1.bf16.msra.mxu0 0
        %372 = vmatprep.subr.bf16.mxu0 0
        %373 = vmatpush1.bf16.msra.mxu0 0
        %374 = vmatprep.subr.bf16.mxu0 0
        %375 = vmatpush1.bf16.msra.mxu0 0
        %376 = vmatprep.subr.bf16.mxu0 0
        %377 = vmatpush1.bf16.msra.mxu0 0
        %378 = vmatprep.subr.bf16.mxu0 0
        %379 = vmatpush1.bf16.msra.mxu0 0
        %380 = vmatprep.subr.bf16.mxu0 0
        %381 = vmatpush1.bf16.msra.mxu0 0
        %382 = vmatprep.subr.bf16.mxu0 0
        %383 = vmatpush1.bf16.msra.mxu0 0
        %384 = vmatprep.subr.bf16.mxu0 0
        %385 = vmatpush1.bf16.msra.mxu0 0
        %386 = vmatprep.mubr.bf16.mxu0 0
        %387 = vmatmul.mubr.bf16.gmra.mrb[0].mxu0 %v311
        %v388 = vpop.f32.mrb[0].mxu0
        %v389 = vadd.f32 %v287, %v388
        %v390 = vpop.f32.mrb[0].mxu0
        %v391 = vadd.f32 %v287, %v390
        %v392 = vpop.f32.mrb[0].mxu0
        %v393 = vpop.f32.mrb[0].mxu0
        %394 = vdwg.mxu0
        %v395 = vmax.f32 %v348, 0.0
        %v396 = vmax.f32 %v350, 0.0
        %v397 = vmax.f32 %v389, 0.0
        %v398 = vmax.f32 %v391, 0.0
        %399 = vrot.lane.b32.xlu0 %v395, 17
        %v400 = vpop.permute.xlu0 %399
        %401 = vrot.lane.b32.xlu0 %v396, 17
        %v402 = vpop.permute.xlu0 %401
        %403 = vrot.lane.b32.xlu0 %v397, 17
        %v404 = vpop.permute.xlu0 %403
        %405 = vrot.lane.b32.xlu0 %v398, 17
        %v406 = vpop.permute.xlu0 %405
        %v407 = vlaneseq
        %v408 = vand.u32 %v407, 127
        %vm409 = vcmp.lt.s32.totalorder %v408, 17
        %v410 = vsel %vm409, %v404, %v406
        %v411 = vsel %vm409, %v402, %v404
        %v412 = vsel %vm409, %v400, %v402
        %v413 = vsel %vm409, %v406, %v400
        %v414 = vld [vmem:[%s5] sm:$0xff]
        %v415 = vld [vmem:[%s5 + $0x8] sm:$0xff]
        %v416 = vld [vmem:[%s5 + $0x10] sm:$0xff]
        %v417 = vld [vmem:[%s5 + $0x18] sm:$0xff]
        %v418 = vmul.f32 %v413, %v414
        %v419 = vmul.f32 %v412, %v415
        %v420 = vmul.f32 %v411, %v416
        %v421 = vmul.f32 %v410, %v417
        %422 = vrot.lane.b32.xlu0 %v395, 16
        %v423 = vpop.permute.xlu0 %422
        %424 = vrot.lane.b32.xlu0 %v396, 16
        %v425 = vpop.permute.xlu0 %424
        %426 = vrot.lane.b32.xlu0 %v397, 16
        %v427 = vpop.permute.xlu0 %426
        %428 = vrot.lane.b32.xlu0 %v398, 16
        %v429 = vpop.permute.xlu0 %428
        %vm430 = vcmp.lt.s32.totalorder %v408, 16
        %v431 = vsel %vm430, %v427, %v429
        %v432 = vsel %vm430, %v425, %v427
        %v433 = vsel %vm430, %v423, %v425
        %v434 = vsel %vm430, %v429, %v423
        %s435 = scalar_lea.vmem %s5, 32
        %v436 = vld [vmem:[%s435] sm:$0xff]
        %v437 = vld [vmem:[%s435 + $0x8] sm:$0xff]
        %v438 = vld [vmem:[%s435 + $0x10] sm:$0xff]
        %v439 = vld [vmem:[%s435 + $0x18] sm:$0xff]
        %v440 = vmul.f32 %v434, %v436
        %v441 = vmul.f32 %v433, %v437
        %v442 = vmul.f32 %v432, %v438
        %v443 = vmul.f32 %v431, %v439
        %444 = vrot.lane.b32.xlu0 %v395, 15
        %v445 = vpop.permute.xlu0 %444
        %446 = vrot.lane.b32.xlu0 %v396, 15
        %v447 = vpop.permute.xlu0 %446
        %448 = vrot.lane.b32.xlu0 %v397, 15
        %v449 = vpop.permute.xlu0 %448
        %450 = vrot.lane.b32.xlu0 %v398, 15
        %v451 = vpop.permute.xlu0 %450
        %vm452 = vcmp.lt.s32.totalorder %v408, 15
        %v453 = vsel %vm452, %v449, %v451
        %v454 = vsel %vm452, %v447, %v449
        %v455 = vsel %vm452, %v445, %v447
        %v456 = vsel %vm452, %v451, %v445
        %s457 = scalar_lea.vmem %s5, 64
        %v458 = vld [vmem:[%s457] sm:$0xff]
        %v459 = vld [vmem:[%s457 + $0x8] sm:$0xff]
        %v460 = vld [vmem:[%s457 + $0x10] sm:$0xff]
        %v461 = vld [vmem:[%s457 + $0x18] sm:$0xff]
        %v462 = vmul.f32 %v456, %v458
        %v463 = vmul.f32 %v455, %v459
        %v464 = vmul.f32 %v454, %v460
        %v465 = vmul.f32 %v453, %v461
        %466 = vrot.lane.b32.xlu0 %v395, 1
        %v467 = vpop.permute.xlu0 %466
        %468 = vrot.lane.b32.xlu0 %v396, 1
        %v469 = vpop.permute.xlu0 %468
        %470 = vrot.lane.b32.xlu0 %v397, 1
        %v471 = vpop.permute.xlu0 %470
        %472 = vrot.lane.b32.xlu0 %v398, 1
        %v473 = vpop.permute.xlu0 %472
        %vm474 = vcmp.lt.s32.totalorder %v408, 1
        %v475 = vsel %vm474, %v471, %v473
        %v476 = vsel %vm474, %v469, %v471
        %v477 = vsel %vm474, %v467, %v469
        %v478 = vsel %vm474, %v473, %v467
        %s479 = scalar_lea.vmem %s5, 96
        %v480 = vld [vmem:[%s479] sm:$0xff]
        %v481 = vld [vmem:[%s479 + $0x8] sm:$0xff]
        %v482 = vld [vmem:[%s479 + $0x10] sm:$0xff]
        %v483 = vld [vmem:[%s479 + $0x18] sm:$0xff]
        %v484 = vmul.f32 %v478, %v480
        %v485 = vmul.f32 %v477, %v481
        %v486 = vmul.f32 %v476, %v482
        %v487 = vmul.f32 %v475, %v483
        %488 = vrot.lane.b32.xlu0 %v395, 127
        %v489 = vpop.permute.xlu0 %488
        %490 = vrot.lane.b32.xlu0 %v396, 127
        %v491 = vpop.permute.xlu0 %490
        %492 = vrot.lane.b32.xlu0 %v397, 127
        %v493 = vpop.permute.xlu0 %492
        %494 = vrot.lane.b32.xlu0 %v398, 127
        %v495 = vpop.permute.xlu0 %494
        %vm496 = vcmp.lt.s32.totalorder %v408, 127
        %v497 = vsel %vm496, %v493, %v495
        %v498 = vsel %vm496, %v491, %v493
        %v499 = vsel %vm496, %v489, %v491
        %v500 = vsel %vm496, %v495, %v489
        %s501 = scalar_lea.vmem %s5, 160
        %v502 = vld [vmem:[%s501] sm:$0xff]
        %v503 = vld [vmem:[%s501 + $0x8] sm:$0xff]
        %v504 = vld [vmem:[%s501 + $0x10] sm:$0xff]
        %v505 = vld [vmem:[%s501 + $0x18] sm:$0xff]
        %v506 = vmul.f32 %v499, %v502
        %v507 = vmul.f32 %v498, %v503
        %v508 = vmul.f32 %v497, %v504
        %v509 = vmul.f32 %v500, %v505
        %510 = vrot.lane.b32.xlu0 %v395, 113
        %v511 = vpop.permute.xlu0 %510
        %512 = vrot.lane.b32.xlu0 %v396, 113
        %v513 = vpop.permute.xlu0 %512
        %514 = vrot.lane.b32.xlu0 %v397, 113
        %v515 = vpop.permute.xlu0 %514
        %516 = vrot.lane.b32.xlu0 %v398, 113
        %v517 = vpop.permute.xlu0 %516
        %vm518 = vcmp.lt.s32.totalorder %v408, 113
        %v519 = vsel %vm518, %v515, %v517
        %v520 = vsel %vm518, %v513, %v515
        %v521 = vsel %vm518, %v511, %v513
        %v522 = vsel %vm518, %v517, %v511
        %s523 = scalar_lea.vmem %s5, 192
        %v524 = vld [vmem:[%s523] sm:$0xff]
        %v525 = vld [vmem:[%s523 + $0x8] sm:$0xff]
        %v526 = vld [vmem:[%s523 + $0x10] sm:$0xff]
        %v527 = vld [vmem:[%s523 + $0x18] sm:$0xff]
        %v528 = vmul.f32 %v521, %v524
        %v529 = vmul.f32 %v520, %v525
        %v530 = vmul.f32 %v519, %v526
        %v531 = vmul.f32 %v522, %v527
        %532 = vrot.lane.b32.xlu0 %v395, 112
        %v533 = vpop.permute.xlu0 %532
        %534 = vrot.lane.b32.xlu0 %v396, 112
        %v535 = vpop.permute.xlu0 %534
        %536 = vrot.lane.b32.xlu0 %v397, 112
        %v537 = vpop.permute.xlu0 %536
        %538 = vrot.lane.b32.xlu0 %v398, 112
        %v539 = vpop.permute.xlu0 %538
        %vm540 = vcmp.lt.s32.totalorder %v408, 112
        %v541 = vsel %vm540, %v537, %v539
        %v542 = vsel %vm540, %v535, %v537
        %v543 = vsel %vm540, %v533, %v535
        %v544 = vsel %vm540, %v539, %v533
        %s545 = scalar_lea.vmem %s5, 224
        %v546 = vld [vmem:[%s545] sm:$0xff]
        %v547 = vld [vmem:[%s545 + $0x8] sm:$0xff]
        %v548 = vld [vmem:[%s545 + $0x10] sm:$0xff]
        %v549 = vld [vmem:[%s545 + $0x18] sm:$0xff]
        %v550 = vmul.f32 %v543, %v546
        %v551 = vmul.f32 %v542, %v547
        %v552 = vmul.f32 %v541, %v548
        %v553 = vmul.f32 %v544, %v549
        %554 = vrot.lane.b32.xlu0 %v395, 111
        %v555 = vpop.permute.xlu0 %554
        %556 = vrot.lane.b32.xlu0 %v396, 111
        %v557 = vpop.permute.xlu0 %556
        %558 = vrot.lane.b32.xlu0 %v397, 111
        %v559 = vpop.permute.xlu0 %558
        %560 = vrot.lane.b32.xlu0 %v398, 111
        %v561 = vpop.permute.xlu0 %560
        %vm562 = vcmp.lt.s32.totalorder %v408, 111
        %v563 = vsel %vm562, %v559, %v561
        %v564 = vsel %vm562, %v557, %v559
        %v565 = vsel %vm562, %v555, %v557
        %v566 = vsel %vm562, %v561, %v555
        %s567 = scalar_lea.vmem %s5, 256
        %v568 = vld [vmem:[%s567] sm:$0xff]
        %v569 = vld [vmem:[%s567 + $0x8] sm:$0xff]
        %v570 = vld [vmem:[%s567 + $0x10] sm:$0xff]
        %v571 = vld [vmem:[%s567 + $0x18] sm:$0xff]
        %v572 = vmul.f32 %v565, %v568
        %v573 = vmul.f32 %v564, %v569
        %v574 = vmul.f32 %v563, %v570
        %v575 = vmul.f32 %v566, %v571
        %v576 = vpack.c.bf16 %v440, %v418
        %v577 = vpack.c.bf16 %v441, %v419
        %v578 = vpack.c.bf16 %v442, %v420
        %v579 = vpack.c.bf16 %v443, %v421
        %v580 = vpack.c.bf16 %v484, %v462
        %v581 = vpack.c.bf16 %v485, %v463
        %v582 = vpack.c.bf16 %v486, %v464
        %v583 = vpack.c.bf16 %v487, %v465
        %v584 = vpack.c.bf16 %v506, %v395
        %v585 = vpack.c.bf16 %v507, %v396
        %v586 = vpack.c.bf16 %v508, %v397
        %v587 = vpack.c.bf16 %v509, %v398
        %v588 = vpack.c.bf16 %v550, %v528
        %v589 = vpack.c.bf16 %v551, %v529
        %v590 = vpack.c.bf16 %v552, %v530
        %v591 = vpack.c.bf16 %v553, %v531
        %v592 = vpack.c.bf16 %v572, %v572
        %v593 = vpack.c.bf16 %v573, %v573
        %v594 = vpack.c.bf16 %v574, %v574
        %v595 = vpack.c.bf16 %v575, %v575
        %v596 = vld [vmem:[%s2] sm:$0xf]
        %598 = vset.pattern.permute.xlu0 0
        %599 = vperm.xlu0 %598, %v276
        %v600 = vpop.permute.xlu0 %599
        %vm602 = vcmask 588800
        %v604 = vsel %vm602, %v596, 0
        %vm606 = vcmask 1043456
        %v608 = vsel %vm606, %v592, 0
        %v611 = vsel %vm606, %v593, 0
        %v614 = vsel %vm606, %v594, 0
        %v617 = vsel %vm606, %v595, 0
        %619 = vmatprep.subr.bf16.mxu0 %v577
        %620 = vmatpush1.bf16.msra.mxu0 %v576
        %621 = vmatprep.subr.bf16.mxu0 %v581
        %622 = vmatpush1.bf16.msra.mxu0 %v580
        %623 = vmatprep.subr.bf16.mxu0 %v585
        %624 = vmatpush1.bf16.msra.mxu0 %v584
        %625 = vmatprep.subr.bf16.mxu0 %v589
        %626 = vmatpush1.bf16.msra.mxu0 %v588
        %627 = vmatprep.subr.bf16.mxu0 %v611
        %628 = vmatpush1.bf16.msra.mxu0 %v608
        %629 = vmatprep.subr.bf16.mxu0 0
        %630 = vmatpush1.bf16.msra.mxu0 0
        %631 = vmatprep.subr.bf16.mxu0 0
        %632 = vmatpush1.bf16.msra.mxu0 0
        %633 = vmatprep.subr.bf16.mxu0 0
        %634 = vmatpush1.bf16.msra.mxu0 0
        %635 = vmatprep.subr.bf16.mxu0 0
        %636 = vmatpush1.bf16.msra.mxu0 0
        %637 = vmatprep.subr.bf16.mxu0 0
        %638 = vmatpush1.bf16.msra.mxu0 0
        %639 = vmatprep.subr.bf16.mxu0 0
        %640 = vmatpush1.bf16.msra.mxu0 0
        %641 = vmatprep.subr.bf16.mxu0 0
        %642 = vmatpush1.bf16.msra.mxu0 0
        %643 = vmatprep.subr.bf16.mxu0 0
        %644 = vmatpush1.bf16.msra.mxu0 0
        %645 = vmatprep.subr.bf16.mxu0 0
        %646 = vmatpush1.bf16.msra.mxu0 0
        %647 = vmatprep.subr.bf16.mxu0 0
        %648 = vmatpush1.bf16.msra.mxu0 0
        %649 = vmatprep.subr.bf16.mxu0 0
        %650 = vmatpush1.bf16.msra.mxu0 0
        %651 = vmatprep.mubr.bf16.mxu0 0
        %652 = vmatmul.mubr.bf16.gmra.mrb[0].mxu0 %v604
        %v653 = vpop.f32.mrb[0].mxu0
        %v654 = vadd.f32 %v600, %v653
        %v655 = vpop.f32.mrb[0].mxu0
        %v656 = vadd.f32 %v600, %v655
        %v657 = vpop.f32.mrb[0].mxu0
        %v658 = vpop.f32.mrb[0].mxu0
        %659 = vdwg.mxu0
        %660 = vmatprep.subr.bf16.mxu0 %v579
        %661 = vmatpush1.bf16.msra.mxu0 %v578
        %662 = vmatprep.subr.bf16.mxu0 %v583
        %663 = vmatpush1.bf16.msra.mxu0 %v582
        %664 = vmatprep.subr.bf16.mxu0 %v587
        %665 = vmatpush1.bf16.msra.mxu0 %v586
        %666 = vmatprep.subr.bf16.mxu0 %v591
        %667 = vmatpush1.bf16.msra.mxu0 %v590
        %668 = vmatprep.subr.bf16.mxu0 %v617
        %669 = vmatpush1.bf16.msra.mxu0 %v614
        %670 = vmatprep.subr.bf16.mxu0 0
        %671 = vmatpush1.bf16.msra.mxu0 0
        %672 = vmatprep.subr.bf16.mxu0 0
        %673 = vmatpush1.bf16.msra.mxu0 0
        %674 = vmatprep.subr.bf16.mxu0 0
        %675 = vmatpush1.bf16.msra.mxu0 0
        %676 = vmatprep.subr.bf16.mxu0 0
        %677 = vmatpush1.bf16.msra.mxu0 0
        %678 = vmatprep.subr.bf16.mxu0 0
        %679 = vmatpush1.bf16.msra.mxu0 0
        %680 = vmatprep.subr.bf16.mxu0 0
        %681 = vmatpush1.bf16.msra.mxu0 0
        %682 = vmatprep.subr.bf16.mxu0 0
        %683 = vmatpush1.bf16.msra.mxu0 0
        %684 = vmatprep.subr.bf16.mxu0 0
        %685 = vmatpush1.bf16.msra.mxu0 0
        %686 = vmatprep.subr.bf16.mxu0 0
        %687 = vmatpush1.bf16.msra.mxu0 0
        %688 = vmatprep.subr.bf16.mxu0 0
        %689 = vmatpush1.bf16.msra.mxu0 0
        %690 = vmatprep.subr.bf16.mxu0 0
        %691 = vmatpush1.bf16.msra.mxu0 0
        %692 = vmatprep.mubr.bf16.mxu0 0
        %693 = vmatmul.mubr.bf16.gmra.mrb[0].mxu0 %v604
        %v694 = vpop.f32.mrb[0].mxu0
        %v695 = vadd.f32 %v600, %v694
        %v696 = vpop.f32.mrb[0].mxu0
        %v697 = vadd.f32 %v600, %v696
        %v698 = vpop.f32.mrb[0].mxu0
        %v699 = vpop.f32.mrb[0].mxu0
        %700 = vdwg.mxu0
        %v701 = vmax.f32 %v654, 0.0
        %v702 = vmax.f32 %v656, 0.0
        %v703 = vmax.f32 %v695, 0.0
        %v704 = vmax.f32 %v697, 0.0
        %v705 = vld [vmem:[%s3] sm:$0xf]
        %v706 = vld [vmem:[%s3 + $0x4] sm:$0xf]
        %v707 = vpack.c.bf16 %v701, %v701
        %v708 = vpack.c.bf16 %v702, %v702
        %v709 = vpack.c.bf16 %v703, %v703
        %v710 = vpack.c.bf16 %v704, %v704
        %712 = vset.pattern.permute.xlu0 0
        %713 = vperm.xlu0 %712, %v277
        %v714 = vpop.permute.xlu0 %713
        %717 = vset.pattern.permute.xlu0 0
        %718 = vperm.xlu0 %717, %v278
        %v719 = vpop.permute.xlu0 %718
        %v723 = vunpack.c.l.b16 %v705
        %v724 = vunpack.c.l.b16 %v706
        %v725 = vpack.c.b16 %v724, %v723
        %vm726 = vcmask 64512
        %v728 = vsel %vm726, %v725, 0
        %v731 = vsel %vm606, %v707, 0
        %v734 = vsel %vm606, %v708, 0
        %v737 = vsel %vm606, %v709, 0
        %v740 = vsel %vm606, %v710, 0
        %742 = vmatprep.subr.bf16.mxu0 %v734
        %743 = vmatpush1.bf16.msra.mxu0 %v731
        %744 = vmatprep.subr.bf16.mxu0 0
        %745 = vmatpush1.bf16.msra.mxu0 0
        %746 = vmatprep.subr.bf16.mxu0 0
        %747 = vmatpush1.bf16.msra.mxu0 0
        %748 = vmatprep.subr.bf16.mxu0 0
        %749 = vmatpush1.bf16.msra.mxu0 0
        %750 = vmatprep.subr.bf16.mxu0 0
        %751 = vmatpush1.bf16.msra.mxu0 0
        %752 = vmatprep.subr.bf16.mxu0 0
        %753 = vmatpush1.bf16.msra.mxu0 0
        %754 = vmatprep.subr.bf16.mxu0 0
        %755 = vmatpush1.bf16.msra.mxu0 0
        %756 = vmatprep.subr.bf16.mxu0 0
        %757 = vmatpush1.bf16.msra.mxu0 0
        %758 = vmatprep.subr.bf16.mxu0 0
        %759 = vmatpush1.bf16.msra.mxu0 0
        %760 = vmatprep.subr.bf16.mxu0 0
        %761 = vmatpush1.bf16.msra.mxu0 0
        %762 = vmatprep.subr.bf16.mxu0 0
        %763 = vmatpush1.bf16.msra.mxu0 0
        %764 = vmatprep.subr.bf16.mxu0 0
        %765 = vmatpush1.bf16.msra.mxu0 0
        %766 = vmatprep.subr.bf16.mxu0 0
        %767 = vmatpush1.bf16.msra.mxu0 0
        %768 = vmatprep.subr.bf16.mxu0 0
        %769 = vmatpush1.bf16.msra.mxu0 0
        %770 = vmatprep.subr.bf16.mxu0 0
        %771 = vmatpush1.bf16.msra.mxu0 0
        %772 = vmatprep.subr.bf16.mxu0 0
        %773 = vmatpush1.bf16.msra.mxu0 0
        %774 = vmatprep.mubr.bf16.mxu0 0
        %775 = vmatmul.mubr.bf16.gmra.mrb[0].mxu0 %v728
        %v776 = vpop.f32.mrb[0].mxu0
        %v777 = vadd.f32 %v714, %v776
        %v778 = vpop.f32.mrb[0].mxu0
        %v779 = vadd.f32 %v714, %v778
        %v780 = vpop.f32.mrb[0].mxu0
        %v781 = vadd.f32 %v719, %v780
        %v782 = vpop.f32.mrb[0].mxu0
        %v783 = vadd.f32 %v719, %v782
        %784 = vdwg.mxu0
        %785 = vmatprep.subr.bf16.mxu0 %v740
        %786 = vmatpush1.bf16.msra.mxu0 %v737
        %787 = vmatprep.subr.bf16.mxu0 0
        %788 = vmatpush1.bf16.msra.mxu0 0
        %789 = vmatprep.subr.bf16.mxu0 0
        %790 = vmatpush1.bf16.msra.mxu0 0
        %791 = vmatprep.subr.bf16.mxu0 0
        %792 = vmatpush1.bf16.msra.mxu0 0
        %793 = vmatprep.subr.bf16.mxu0 0
        %794 = vmatpush1.bf16.msra.mxu0 0
        %795 = vmatprep.subr.bf16.mxu0 0
        %796 = vmatpush1.bf16.msra.mxu0 0
        %797 = vmatprep.subr.bf16.mxu0 0
        %798 = vmatpush1.bf16.msra.mxu0 0
        %799 = vmatprep.subr.bf16.mxu0 0
        %800 = vmatpush1.bf16.msra.mxu0 0
        %801 = vmatprep.subr.bf16.mxu0 0
        %802 = vmatpush1.bf16.msra.mxu0 0
        %803 = vmatprep.subr.bf16.mxu0 0
        %804 = vmatpush1.bf16.msra.mxu0 0
        %805 = vmatprep.subr.bf16.mxu0 0
        %806 = vmatpush1.bf16.msra.mxu0 0
        %807 = vmatprep.subr.bf16.mxu0 0
        %808 = vmatpush1.bf16.msra.mxu0 0
        %809 = vmatprep.subr.bf16.mxu0 0
        %810 = vmatpush1.bf16.msra.mxu0 0
        %811 = vmatprep.subr.bf16.mxu0 0
        %812 = vmatpush1.bf16.msra.mxu0 0
        %813 = vmatprep.subr.bf16.mxu0 0
        %814 = vmatpush1.bf16.msra.mxu0 0
        %815 = vmatprep.subr.bf16.mxu0 0
        %816 = vmatpush1.bf16.msra.mxu0 0
        %817 = vmatprep.mubr.bf16.mxu0 0
        %818 = vmatmul.mubr.bf16.gmra.mrb[0].mxu0 %v728
        %v819 = vpop.f32.mrb[0].mxu0
        %v820 = vadd.f32 %v714, %v819
        %v821 = vpop.f32.mrb[0].mxu0
        %v822 = vadd.f32 %v714, %v821
        %v823 = vpop.f32.mrb[0].mxu0
        %v824 = vadd.f32 %v719, %v823
        %v825 = vpop.f32.mrb[0].mxu0
        %v826 = vadd.f32 %v719, %v825
        %827 = vdwg.mxu0
        %v828 = vunpack.c.l.bf16 %v279
        %v829 = vunpack.c.h.bf16 %v279
        %v830 = vunpack.c.l.bf16 %v280
        %v831 = vunpack.c.h.bf16 %v280
        %v832 = vunpack.c.l.bf16 %v281
        %v833 = vunpack.c.h.bf16 %v281
        %v834 = vunpack.c.l.bf16 %v282
        %v835 = vunpack.c.h.bf16 %v282
        %v836 = vadd.f32 %v777, %v828
        %v837 = vadd.f32 %v779, %v829
        %v838 = vadd.f32 %v820, %v830
        %v839 = vadd.f32 %v822, %v831
        %v840 = vadd.f32 %v781, %v832
        %v841 = vadd.f32 %v783, %v833
        %v842 = vadd.f32 %v824, %v834
        %v843 = vadd.f32 %v826, %v835
        %v844 = vmax.f32 %v836, 0.0
        %v845 = vmax.f32 %v837, 0.0
        %v846 = vmax.f32 %v838, 0.0
        %v847 = vmax.f32 %v839, 0.0
        %v848 = vmax.f32 %v840, 0.0
        %v849 = vmax.f32 %v841, 0.0
        %v850 = vmax.f32 %v842, 0.0
        %v851 = vmax.f32 %v843, 0.0
        %v852 = vpack.c.bf16 %v848, %v844
        %v853 = vpack.c.bf16 %v849, %v845
        %v854 = vpack.c.bf16 %v850, %v846
        %v855 = vpack.c.bf16 %v851, %v847
        %v860 = vunpack.c.l.b16 %v852
        %v861 = vunpack.c.l.b16 %v853
        %v862 = vunpack.c.l.b16 %v854
        %v863 = vunpack.c.l.b16 %v855
        %v864 = vunpack.c.h.b16 %v852
        %v865 = vunpack.c.h.b16 %v853
        %v866 = vunpack.c.h.b16 %v854
        %v867 = vunpack.c.h.b16 %v855
        %v868 = vpack.c.b16 %v861, %v860
        %v869 = vpack.c.b16 %v863, %v862
        %v870 = vpack.c.b16 %v865, %v864
        %v871 = vpack.c.b16 %v867, %v866
        %876 = vst [vmem:[%s271] sm:$0xff] %v868
        %877 = vst [vmem:[%s271 + $0x8] sm:$0xff] %v869
        %878 = vst [vmem:[%s271 + $0x10] sm:$0xff] %v870
        %879 = vst [vmem:[%s271 + $0x18] sm:$0xff] %v871
        %s880 = sand.u32 %s156, 1
        %s881 = sand.u32 %s156, 1
        %s882 = smul.addr %s881, 32
        %s883 = scalar_lea.vmem [#allocation3], %s882
        // Predicated region
        $region68: #{bottleneck_pallas.1} parent=62 // pred_check
          %p884 = pneg %p166
        $region69: #{bottleneck_pallas.1} parent=62 // pred_check_branch
          %886 = sbr.rel (%p884) target = $region71
        $region70: #{bottleneck_pallas.1} parent=62 // pred_region
          %s887 = smul.u32 4, %s17
          %s888 = smul.addr %s887, 4
          %s889 = scalar_lea.vmem %s6, %s888
          // Predicated region
          $region72: #{bottleneck_pallas.1} parent=70 // pred_check
            _
          $region73: #{bottleneck_pallas.1} parent=70 // pred_check_branch
            %891 = sbr.rel (0) target = $region75
          $region74: #{bottleneck_pallas.1} parent=70 // pred_region
            // Predicated region
            $region76: #{bottleneck_pallas.1} parent=74 // pred_check
              _
            $region77: #{bottleneck_pallas.1} parent=74 // pred_check_branch
              %893 = sbr.rel (0) target = $region79
            $region78: #{bottleneck_pallas.1} parent=74 // pred_region
              loop: start=0, step=1, limit=1
              $region80: #{bottleneck_pallas.1} parent=78 // loop_pre_header
                _
              $region81: #{bottleneck_pallas.1} parent=78 // loop_header
                %s895 = sphi 0, %s899
                %p896 = scmp.ge.s32.totalorder %s895, 1
                %s900 = sphi %s883, %s883
                %s901 = sphi %s889, %s889
              $region82: #{bottleneck_pallas.1} parent=78 // loop_header_branch
                %898 = sbr.rel (%p896) target = $region86
              $region83: #{bottleneck_pallas.1} parent=78 // loop_body
                %v902 = vld [vmem:[%s900] sm:$0xff]
                %903 = vst [vmem:[%s901] sm:$0xff] %v902
                %v904 = vld [vmem:[%s900 + $0x8] sm:$0xff]
                %905 = vst [vmem:[%s901 + $0x8] sm:$0xff] %v904
                %v906 = vld [vmem:[%s900 + $0x10] sm:$0xff]
                %907 = vst [vmem:[%s901 + $0x20] sm:$0xff] %v906
                %v908 = vld [vmem:[%s900 + $0x18] sm:$0xff]
                %909 = vst [vmem:[%s901 + $0x28] sm:$0xff] %v908
              $region84: #{bottleneck_pallas.1} parent=78 // loop_footer
                %s899 = sadd.s32 1, %s895
              $region85: #{bottleneck_pallas.1} parent=78 // loop_footer_branch
                %894 = sbr.rel target = $region81
              $region86: #{bottleneck_pallas.1} parent=78 // loop_exit
                _
            $region79: #{bottleneck_pallas.1} parent=74 // pred_fallthru
              _
            // Predicated region
            $region87: #{bottleneck_pallas.1} parent=74 // pred_check
              _
            $region88: #{bottleneck_pallas.1} parent=74 // pred_check_branch
              %911 = sbr.rel target = $region90
            $region89: #{bottleneck_pallas.1} parent=74 // pred_region
              _
            $region90: #{bottleneck_pallas.1} parent=74 // pred_fallthru
              _
          $region75: #{bottleneck_pallas.1} parent=70 // pred_fallthru
            _
          %912 = vnop
        $region71: #{bottleneck_pallas.1} parent=62 // pred_fallthru
          _
      $region63: #{bottleneck_pallas.1} parent=5 // pred_fallthru
        _
      %p913 = scmp.le.s32.totalorder 2, %s12
      // Predicated region
      $region91: #{bottleneck_pallas.1} parent=5 // pred_check
        %p914 = pneg %p913
      $region92: #{bottleneck_pallas.1} parent=5 // pred_check_branch
        %916 = sbr.rel (%p914) target = $region94
      $region93: #{bottleneck_pallas.1} parent=5 // pred_region
        %s917 = ssub.s32 %s12, 2
        // Predicated region
        $region95: #{bottleneck_pallas.1} parent=93 // pred_check
          %p918 = pneg %p172
        $region96: #{bottleneck_pallas.1} parent=93 // pred_check_branch
          %920 = sbr.rel (%p918) target = $region98
        $region97: #{bottleneck_pallas.1} parent=93 // pred_region
          %s921 = sand.u32 %s157, 1
          %s922 = sand.u32 %s157, 1
          %s923 = smul.addr %s922, 32
          %s924 = scalar_lea.vmem [#allocation3], %s923
        $region98: #{bottleneck_pallas.1} parent=93 // pred_fallthru
          _
      $region94: #{bottleneck_pallas.1} parent=5 // pred_fallthru
        _
    $region6: #{bottleneck_pallas.1} parent=1 // loop_footer
      %s16 = sadd.s32 1, %s12
    $region7: #{bottleneck_pallas.1} parent=1 // loop_footer_branch
      %11 = sbr.rel target = $region3
    $region8: #{bottleneck_pallas.1} parent=1 // loop_exit
      _

</llo_original>
